<compile_context>
chip_gen: v5e
topology: v5e:2x2
jax: 0.10.0
libtpu: 0.0.40
codegen_flags: <defaults>
</compile_context>

<pallas_src>
import functools

import jax
import jax.numpy as jnp
from jax.experimental import pallas as pl
from jax.experimental.pallas import tpu as pltpu


def _layernorm_kernel(x_ref, g_ref, b_ref, o_ref, *, eps, features):
    # x_ref: (block_rows, features_padded) tile in VMEM; features on the lane axis.
    x = x_ref[...].astype(jnp.float32)
    g = g_ref[...].astype(jnp.float32)   # (1, features_padded) — read/cast once
    b = b_ref[...].astype(jnp.float32)   # (1, features_padded)

    # Single-pass (sum, sum-of-squares) statistics: avoids keeping a full-tile
    # `diff` intermediate live in VMEM. Divisors use the *true* feature count, so
    # zero-padded lanes (if any) contribute nothing.
    inv_n = jnp.float32(1.0 / features)
    mean = jnp.sum(x, axis=-1, keepdims=True) * inv_n
    sumsq = jnp.sum(x * x, axis=-1, keepdims=True)
    # torch.std is unbiased by default -> divide by (N - 1).
    var = (sumsq - jnp.float32(features) * mean * mean) * jnp.float32(1.0 / (features - 1))
    var = jnp.maximum(var, jnp.float32(0.0))   # guard tiny negative from cancellation
    std = jnp.sqrt(var)

    # Per-row exact reciprocal on the (rows, 1) column, then a single VPU multiply
    # over the tile instead of a full-tile divide. (x - mean) is recomputed inline
    # so no centered full-tile intermediate needs to stay resident.
    inv = pl.reciprocal(std + jnp.float32(eps), approx=False)
    o_ref[...] = (g * ((x - mean) * inv) + b).astype(o_ref.dtype)


def _choose_block_rows(rows, features_padded, dtype_bytes,
                       target_bytes=3 * 1024 * 1024, max_rows=16384):
    """Row tile ~3 MiB per buffer in the I/O dtype, multiple of 32, >= ~4 grid steps."""
    per_row = max(1, features_padded * dtype_bytes)
    br = (target_bytes // per_row) // 32 * 32
    br = min(max(br, 32), max_rows)
    # Keep at least ~4 grid steps on larger inputs so the 1-D row grid load-balances
    # across both v7x TensorCores (dimension_semantics=("parallel",)).
    if rows > 4 * 32:
        quarter = ((-(-rows // 4)) + 31) // 32 * 32   # round_up(ceil(rows/4), 32)
        br = min(br, max(quarter, 32))
    if rows <= br:
        return rows          # single full-extent block (exempt from (8,128) rule)
    return br


def layer_norm(x, a_2, b_2, eps=1e-6, block_rows=None):
    """x: (..., features); a_2, b_2: (features,)."""
    features = x.shape[-1]
    assert features > 1, "LayerNorm with unbiased std needs features > 1 (N-1 divide)."
    orig_shape = x.shape
    x2d = x.reshape(-1, features)
    rows = x2d.shape[0]

    # Lane-density guard: pad the feature axis to a multiple of 128 so output stores
    # stay unmasked `vst`. Zero padding is exact for the sums (true `features` used
    # as the divisor in-kernel); padded lanes are sliced off afterwards.
    lane = 128
    features_padded = ((features + lane - 1) // lane) * lane
    if features_padded != features:
        pad = features_padded - features
        x2d = jnp.pad(x2d, ((0, 0), (0, pad)))
        g = jnp.pad(a_2, (0, pad)).reshape(1, features_padded)
        b = jnp.pad(b_2, (0, pad)).reshape(1, features_padded)
    else:
        g = a_2.reshape(1, features)
        b = b_2.reshape(1, features)

    if block_rows is None:
        block_rows = _choose_block_rows(rows, features_padded,
                                        jnp.dtype(x2d.dtype).itemsize)

    kernel = functools.partial(_layernorm_kernel, eps=eps, features=features)

    out = pl.pallas_call(
        kernel,
        out_shape=jax.ShapeDtypeStruct((rows, features_padded), x.dtype),
        grid_spec=pltpu.PrefetchScalarGridSpec(
            num_scalar_prefetch=0,
            grid=(pl.cdiv(rows, block_rows),),
            in_specs=[
                pl.BlockSpec((block_rows, features_padded), lambda i: (i, 0)),
                pl.BlockSpec((1, features_padded), lambda i: (0, 0)),
                pl.BlockSpec((1, features_padded), lambda i: (0, 0)),
            ],
            out_specs=pl.BlockSpec((block_rows, features_padded), lambda i: (i, 0)),
        ),
        compiler_params=pltpu.CompilerParams(
            dimension_semantics=("parallel",),   # shards rows across both TCs on v7x
            vmem_limit_bytes=40 * 1024 * 1024,   # ~12-24 MiB working set + headroom
        ),
    )(x2d, g, b)

    if features_padded != features:
        out = out[:, :features]
    return out.reshape(orig_shape)


if __name__ == "__main__":
    key = jax.random.PRNGKey(0)
    # hidden=128 keeps the output lane-dense (features multiple of 128) while small.
    batch, seq, hidden = 2, 8, 128

    x = jax.random.normal(key, (batch, seq, hidden), dtype=jnp.float32)

    # Deterministic parameter init matching nn.Parameter(torch.ones/zeros(features))
    a_2 = jnp.ones((hidden,), dtype=jnp.float32)
    b_2 = jnp.zeros((hidden,), dtype=jnp.float32)

    out = layer_norm(x, a_2, b_2, eps=1e-6)
    out = jax.block_until_ready(out)

    # Reference check (pure JAX, mirrors torch semantics: unbiased std, eps on std).
    mean = jnp.mean(x, axis=-1, keepdims=True)
    std = jnp.sqrt(jnp.sum((x - mean) ** 2, axis=-1, keepdims=True) / (hidden - 1))
    ref = a_2 * (x - mean) / (std + 1e-6) + b_2
    assert jnp.allclose(out, ref, atol=1e-5, rtol=1e-5), "mismatch vs reference"

    print("KERNEL_OK")
</pallas_src>

<mosaic_0001>
module attributes {stable_mosaic.version = 11 : i64} {
  func.func @_layernorm_kernel(%arg0: i32, %arg1: memref<16x128xf32, #tpu.memory_space<vmem>>, %arg2: memref<1x128xf32, #tpu.memory_space<vmem>>, %arg3: memref<1x128xf32, #tpu.memory_space<vmem>>, %arg4: memref<16x128xf32, #tpu.memory_space<vmem>>) attributes {dimension_semantics = [#tpu.dimension_semantics<parallel>], iteration_bounds = array<i64: 1>, scalar_prefetch = 0 : i64, scratch_operands = 0 : i64, tpu.core_type = #tpu.core_type<tc>, window_params = [{transform_indices = @transform_0, window_bounds = array<i64: 16, 128>}, {pipeline_mode = #tpu.pipeline_mode<synchronous>, transform_indices = @transform_1, window_bounds = array<i64: 1, 128>}, {pipeline_mode = #tpu.pipeline_mode<synchronous>, transform_indices = @transform_2, window_bounds = array<i64: 1, 128>}, {transform_indices = @transform_3, window_bounds = array<i64: 16, 128>}]} {
    %c0 = arith.constant 0 : index
    %c0_0 = arith.constant 0 : index
    %0 = vector.load %arg1[%c0, %c0_0] : memref<16x128xf32, #tpu.memory_space<vmem>>, vector<16x128xf32>
    %c0_1 = arith.constant 0 : index
    %c0_2 = arith.constant 0 : index
    %1 = vector.load %arg2[%c0_1, %c0_2] : memref<1x128xf32, #tpu.memory_space<vmem>>, vector<1x128xf32>
    %c0_3 = arith.constant 0 : index
    %c0_4 = arith.constant 0 : index
    %2 = vector.load %arg3[%c0_3, %c0_4] : memref<1x128xf32, #tpu.memory_space<vmem>>, vector<1x128xf32>
    %cst = arith.constant dense<0.000000e+00> : vector<16xf32>
    %3 = vector.multi_reduction <add>, %0, %cst [1] : vector<16x128xf32> to vector<16xf32>
    %4 = vector.shape_cast %3 : vector<16xf32> to vector<16x1xf32>
    %cst_5 = arith.constant 7.812500e-03 : f32
    %5 = vector.broadcast %cst_5 : f32 to vector<16x1xf32>
    %6 = arith.mulf %4, %5 : vector<16x1xf32>
    %7 = arith.mulf %0, %0 : vector<16x128xf32>
    %cst_6 = arith.constant dense<0.000000e+00> : vector<16xf32>
    %8 = vector.multi_reduction <add>, %7, %cst_6 [1] : vector<16x128xf32> to vector<16xf32>
    %9 = vector.shape_cast %8 : vector<16xf32> to vector<16x1xf32>
    %cst_7 = arith.constant 1.280000e+02 : f32
    %10 = vector.broadcast %cst_7 : f32 to vector<16x1xf32>
    %11 = arith.mulf %10, %6 : vector<16x1xf32>
    %12 = arith.mulf %11, %6 : vector<16x1xf32>
    %13 = arith.subf %9, %12 : vector<16x1xf32>
    %cst_8 = arith.constant 0.00787401571 : f32
    %14 = vector.broadcast %cst_8 : f32 to vector<16x1xf32>
    %15 = arith.mulf %13, %14 : vector<16x1xf32>
    %cst_9 = arith.constant 0.000000e+00 : f32
    %16 = vector.broadcast %cst_9 : f32 to vector<16x1xf32>
    %17 = arith.maximumf %15, %16 : vector<16x1xf32>
    %18 = math.sqrt %17 : vector<16x1xf32>
    %cst_10 = arith.constant 9.99999997E-7 : f32
    %19 = vector.broadcast %cst_10 : f32 to vector<16x1xf32>
    %20 = arith.addf %18, %19 : vector<16x1xf32>
    %21 = tpu.reciprocal %20 : vector<16x1xf32> -> vector<16x1xf32>
    %22 = vector.broadcast %6 : vector<16x1xf32> to vector<16x128xf32>
    %23 = arith.subf %0, %22 : vector<16x128xf32>
    %24 = vector.broadcast %21 : vector<16x1xf32> to vector<16x128xf32>
    %25 = arith.mulf %23, %24 : vector<16x128xf32>
    %26 = vector.broadcast %1 : vector<1x128xf32> to vector<16x128xf32>
    %27 = arith.mulf %26, %25 : vector<16x128xf32>
    %28 = vector.broadcast %2 : vector<1x128xf32> to vector<16x128xf32>
    %29 = arith.addf %27, %28 : vector<16x128xf32>
    %c0_11 = arith.constant 0 : index
    %c0_12 = arith.constant 0 : index
    %30 = vector.load %arg4[%c0_11, %c0_12] : memref<16x128xf32, #tpu.memory_space<vmem>>, vector<16x128xf32>
    tpu.vector_store %arg4[%c0_11, %c0_12], %29 {strides = array<i32>} : memref<16x128xf32, #tpu.memory_space<vmem>>, vector<16x128xf32>,
    return
  }
  func.func @transform_0(%arg0: i32) -> (i32, i32) {
    %c0_i32 = arith.constant 0 : i32
    %c0_i32_0 = arith.constant 0 : i32
    return %arg0, %c0_i32 : i32, i32
  }
  func.func @transform_1(%arg0: i32) -> (i32, i32) {
    %c0_i32 = arith.constant 0 : i32
    %c0_i32_0 = arith.constant 0 : i32
    %c0_i32_1 = arith.constant 0 : i32
    return %c0_i32, %c0_i32_0 : i32, i32
  }
  func.func @transform_2(%arg0: i32) -> (i32, i32) {
    %c0_i32 = arith.constant 0 : i32
    %c0_i32_0 = arith.constant 0 : i32
    %c0_i32_1 = arith.constant 0 : i32
    return %c0_i32, %c0_i32_0 : i32, i32
  }
  func.func @transform_3(%arg0: i32) -> (i32, i32) {
    %c0_i32 = arith.constant 0 : i32
    %c0_i32_0 = arith.constant 0 : i32
    return %arg0, %c0_i32 : i32, i32
  }
}

</mosaic_0001>

<llo_original>
// kernel: tpu_custom_call.1
$region0: #{tpu_custom_call.1}
  #allocation0 [shape = 'u32[]', space=smem, size = 0x4, offset = 0x4, fixed_abs, tag = 'smem constant byte address 0x4 - core index']
  #allocation1 [shape = 'u32[72,128]{1,0:T(1,128)}', space=vmem, size = 0x9000, scoped, tag = 'internal scratch']
  %s0 = inlined_call_operand.hbm [shape: f32[16,128], index: 0, kind: input, shape index: {}]
  %s1 = inlined_call_operand.hbm [shape: f32[1,128], index: 1, kind: input, shape index: {}]
  %s2 = inlined_call_operand.vmem [shape: f32[1,128], index: 2, kind: input, shape index: {}]
  %s3 = inlined_call_operand.hbm [shape: f32[16,128], index: 3, kind: output, shape index: {}]
  %s4 = sld [smem:[#allocation0]]
  $region30: #{tpu_custom_call.1} parent=0
    _
  %s6 = ssub.s32 1, %s4
  %s7 = scalar_select 0, %s6, %s4
  $region1: #{tpu_custom_call.1} parent=0
    #allocation2 [shape = 'u8[8192]{0}', space=vmem, size = 0x2000, scoped, tag = 'input window, operand 0, single buffered']
    #allocation3 [shape = 's32[1]{0}', space=sflag, size = 0x4, scoped, tag = 'scoped memory for tpu_custom_call.1']
    #allocation4 [shape = 's32[1]{0}', space=sflag, size = 0x4, scoped, tag = 'scoped memory for tpu_custom_call.1']
    #allocation5 [shape = 'u8[512]{0}', space=vmem, size = 0x400, scoped, tag = 'input window, operand 1, single buffered']
    #allocation6 [shape = 's32[1]{0}', space=sflag, size = 0x4, scoped, tag = 'scoped memory for tpu_custom_call.1']
    #allocation7 [shape = 'u8[8192]{0}', space=vmem, size = 0x2000, scoped, tag = 'output window, operand 0, single buffered']
    %8 = vsyncpa [#allocation3], 0
    %9 = vsyncpa [#allocation6], 0
    %10 = vsyncpa [#allocation4], 0
    // Predicated region
    $region2: #{tpu_custom_call.1} parent=1 // pred_check
      _
    $region3: #{tpu_custom_call.1} parent=1 // pred_check_branch
      %12 = sbr.rel (0) target = $region5
    $region4: #{tpu_custom_call.1} parent=1 // pred_region
      %14 = vsyncadd [#allocation3], 0
      %s15 = sshll.u32 %s0, 4
      %s16 = int_to_ptr.hbm [resolvable:$true] %s15
      %s17 = sshll.u32 [#allocation2], 4
      %s18 = int_to_ptr.vmem [resolvable:$true] %s17
      %23 = dma.hbm_to_vmem [thread:$0]  %s16, 256, %s18, [#allocation3], 128, 128, 8
    $region5: #{tpu_custom_call.1} parent=1 // pred_fallthru
      _
    // Predicated region
    $region6: #{tpu_custom_call.1} parent=1 // pred_check
      _
    $region7: #{tpu_custom_call.1} parent=1 // pred_check_branch
      %25 = sbr.rel (0) target = $region9
    $region8: #{tpu_custom_call.1} parent=1 // pred_region
      %27 = vsyncadd [#allocation6], 0
      %s29 = sshll.u32 %s1, 4
      %s30 = int_to_ptr.hbm [resolvable:$true] %s29
      %s31 = sshll.u32 [#allocation5], 4
      %s32 = int_to_ptr.vmem [resolvable:$true] %s31
      %34 = dma.hbm_to_vmem [thread:$0]  %s30, 16, %s32, [#allocation6]
    $region9: #{tpu_custom_call.1} parent=1 // pred_fallthru
      _
    // Predicated region
    $region10: #{tpu_custom_call.1} parent=1 // pred_check
      _
    $region11: #{tpu_custom_call.1} parent=1 // pred_check_branch
      %36 = sbr.rel (0) target = $region13
    $region12: #{tpu_custom_call.1} parent=1 // pred_region
      _
    $region13: #{tpu_custom_call.1} parent=1 // pred_fallthru
      _
    // Predicated region
    $region14: #{tpu_custom_call.1} parent=1 // pred_check
      _
    $region15: #{tpu_custom_call.1} parent=1 // pred_check_branch
      %38 = sbr.rel (0) target = $region17
    $region16: #{tpu_custom_call.1} parent=1 // pred_region
      %40 = dma.done [#allocation3], 256
    $region17: #{tpu_custom_call.1} parent=1 // pred_fallthru
      _
    // Predicated region
    $region18: #{tpu_custom_call.1} parent=1 // pred_check
      _
    $region19: #{tpu_custom_call.1} parent=1 // pred_check_branch
      %42 = sbr.rel (0) target = $region21
    $region20: #{tpu_custom_call.1} parent=1 // pred_region
      %44 = dma.done [#allocation6], 16
    $region21: #{tpu_custom_call.1} parent=1 // pred_fallthru
      _
    %v45 = vld [vmem:[#allocation2] sm:$0xff]
    %v46 = vld [vmem:[#allocation2 + $0x8] sm:$0xff]
    %v47 = vld [vmem:[#allocation5] sm:$0x1]
    %v48 = vld [vmem:[%s2] sm:$0x1]
    %49 = vadd.xlane.f32.xlu0 %v45
    %v50 = vpop.xlane.xlu0 %49
    %51 = vadd.xlane.f32.xlu0 %v46
    %v52 = vpop.xlane.xlu0 %51
    %v53 = vmul.f32 %v50, 0.0078125
    %v54 = vmul.f32 %v52, 0.0078125
    %v55 = vmul.f32 %v45, %v45
    %v56 = vmul.f32 %v46, %v46
    %57 = vadd.xlane.f32.xlu0 %v55
    %v58 = vpop.xlane.xlu0 %57
    %59 = vadd.xlane.f32.xlu0 %v56
    %v60 = vpop.xlane.xlu0 %59
    %v61 = vmul.f32 %v53, 128.0
    %v62 = vmul.f32 %v54, 128.0
    %v63 = vmul.f32 %v61, %v53
    %v64 = vmul.f32 %v62, %v54
    %v65 = vsub.f32 %v58, %v63
    %v66 = vsub.f32 %v60, %v64
    %v67 = vmul.f32 %v65, 0.007874016
    %v68 = vmul.f32 %v66, 0.007874016
    %v69 = vmax.f32 %v67, 0.0
    %v70 = vmax.f32 %v68, 0.0
    %v71 = vrsqrt.pop %v69
    %v72 = vmul.f32 %v71, %v69
    %v73 = vmul.f32 %v72, %v71
    %v74 = vmul.f32 0.5, %v73
    %v75 = vsub.f32 1.5, %v74
    %v76 = vmul.f32 %v71, %v75
    %v77 = vmul.f32 %v69, %v76
    %vm78 = vcmp.eq.f32.partialorder %v69, inf
    %v79 = vsel %vm78, %v69, %v77
    %vm80 = vcmp.eq.f32.partialorder %v69, 0.0
    %v81 = vand.u32 %v69, 2147483648
    %v82 = vsel %vm80, %v81, %v79
    %v83 = vrsqrt.pop %v70
    %v84 = vmul.f32 %v83, %v70
    %v85 = vmul.f32 %v84, %v83
    %v86 = vmul.f32 0.5, %v85
    %v87 = vsub.f32 1.5, %v86
    %v88 = vmul.f32 %v83, %v87
    %v89 = vmul.f32 %v70, %v88
    %vm90 = vcmp.eq.f32.partialorder %v70, inf
    %v91 = vsel %vm90, %v70, %v89
    %vm92 = vcmp.eq.f32.partialorder %v70, 0.0
    %v93 = vand.u32 %v70, 2147483648
    %v94 = vsel %vm92, %v93, %v91
    %v95 = vadd.f32 %v82, 1e-06
    %v96 = vadd.f32 %v94, 1e-06
    %v97 = vrcp.pop %v95
    %v98 = vmul.f32 %v95, %v97
    %v99 = vsub.f32 1.0, %v98
    %v100 = vmul.f32 %v97, %v99
    %v101 = vadd.f32 %v97, %v100
    %vm102 = vweird.f32 %v95
    %vm103 = vweird.f32 %v97
    %vm104 = vmor %vm102, %vm103
    %v105 = vsel %vm104, %v97, %v101
    %v106 = vand.u32 2147483647, %v95
    %vm107 = vcmp.eq.f32.partialorder %v106, 8.507059e+37
    %v108 = vand.u32 %v95, 2147483648
    %v109 = vor.u32 1.1754944e-38, %v108
    %v110 = vsel %vm107, %v109, %v105
    %v111 = vrcp.pop %v96
    %v112 = vmul.f32 %v96, %v111
    %v113 = vsub.f32 1.0, %v112
    %v114 = vmul.f32 %v111, %v113
    %v115 = vadd.f32 %v111, %v114
    %vm116 = vweird.f32 %v96
    %vm117 = vweird.f32 %v111
    %vm118 = vmor %vm116, %vm117
    %v119 = vsel %vm118, %v111, %v115
    %v120 = vand.u32 2147483647, %v96
    %vm121 = vcmp.eq.f32.partialorder %v120, 8.507059e+37
    %v122 = vand.u32 %v96, 2147483648
    %v123 = vor.u32 1.1754944e-38, %v122
    %v124 = vsel %vm121, %v123, %v119
    %v125 = vsub.f32 %v45, %v53
    %v126 = vsub.f32 %v46, %v54
    %v127 = vmul.f32 %v125, %v110
    %v128 = vmul.f32 %v126, %v124
    %v130 = vperm.slane %v47, 0
    %v132 = vmul.f32 %v130, %v127
    %v133 = vmul.f32 %v130, %v128
    %v135 = vperm.slane %v48, 0
    %v137 = vadd.f32 %v132, %v135
    %v138 = vadd.f32 %v133, %v135
    %139 = vst [vmem:[#allocation7] sm:$0xff] %v137
    %140 = vst [vmem:[#allocation7 + $0x8] sm:$0xff] %v138
    // Predicated region
    $region22: #{tpu_custom_call.1} parent=1 // pred_check
      _
    $region23: #{tpu_custom_call.1} parent=1 // pred_check_branch
      %142 = sbr.rel (0) target = $region25
    $region24: #{tpu_custom_call.1} parent=1 // pred_region
      %144 = vsyncadd [#allocation4], 0
      %s145 = sshll.u32 [#allocation7], 4
      %s146 = int_to_ptr.vmem [resolvable:$true] %s145
      %s147 = sshll.u32 %s3, 4
      %s148 = int_to_ptr.hbm [resolvable:$true] %s147
      %153 = dma.vmem_to_hbm [thread:$0]  %s146, 256, %s148, [#allocation4], 128, 128, 8
    $region25: #{tpu_custom_call.1} parent=1 // pred_fallthru
      _
    // Predicated region
    $region26: #{tpu_custom_call.1} parent=1 // pred_check
      _
    $region27: #{tpu_custom_call.1} parent=1 // pred_check_branch
      %155 = sbr.rel (0) target = $region29
    $region28: #{tpu_custom_call.1} parent=1 // pred_region
      %157 = dma.done [#allocation4], 256
    $region29: #{tpu_custom_call.1} parent=1 // pred_fallthru
      _
    %158 = vsyncpa [#allocation3], 1
    %159 = vsyncpa [#allocation6], 1
    %160 = vsyncpa [#allocation4], 1

</llo_original>
